<compile_context>
chip_gen: v7x
topology: tpu7x:2x2x1
jax: 0.10.0
libtpu: 0.0.40
codegen_flags: <defaults>
</compile_context>

<pallas_src>
import functools

import jax
import jax.numpy as jnp
from jax.experimental import pallas as pl
from jax.experimental.pallas import tpu as pltpu


def _layernorm_kernel(x_ref, gamma_ref, beta_ref, o_ref, *, eps, true_h):
    # x_ref: (tm, Hp) row tile; gamma/beta: (1, Hp)
    x = x_ref[...].astype(jnp.float32)
    hp = x.shape[-1]
    inv_h = jnp.float32(1.0 / true_h)

    if true_h != hp:
        # Hidden dim was padded to a lane-dense multiple of 128; mask the padded
        # columns out of the statistics (padded inputs are zeros already, but the
        # squared deviations must be masked explicitly).
        col = jax.lax.broadcasted_iota(jnp.int32, x.shape, dimension=1)
        mask = col < true_h
        xm = jnp.where(mask, x, 0.0)
    else:
        mask = None
        xm = x

    u = jnp.sum(xm, axis=-1, keepdims=True) * inv_h        # mean over hidden
    d = x - u
    if mask is not None:
        d = jnp.where(mask, d, 0.0)
    s = jnp.sum(d * d, axis=-1, keepdims=True) * inv_h      # biased variance
    inv = jax.lax.rsqrt(s + eps)                             # eps inside sqrt
    y = d * inv

    g = gamma_ref[...].astype(jnp.float32)
    b = beta_ref[...].astype(jnp.float32)
    o_ref[...] = (g * y + b).astype(o_ref.dtype)


def _pick_row_tile(n_rows, h_pad, dtype):
    """Largest row tile (multiple of 8, <=2048) whose double-buffered in/out
    tiles plus f32 compute temporaries fit a ~36 MiB VMEM budget (safe on
    v5e/v6e's 128 MiB and v7x's 64 MiB physical VMEM)."""
    itemsize = jnp.dtype(dtype).itemsize
    # 2x input + 2x output (double-buffered) + ~3 f32 block-sized temporaries
    bytes_per_row = h_pad * (4 * itemsize + 3 * 4)
    budget = 36 * 1024 * 1024
    tm = budget // bytes_per_row
    tm = min(2048, tm)
    tm = min(tm, ((n_rows + 7) // 8) * 8)   # don't over-pad tiny inputs
    tm = max(8, (tm // 8) * 8)
    return int(tm)


def bert_layer_norm(x, gamma, beta, eps=1e-12, *, row_tile=None,
                    vmem_limit_bytes=48 * 1024 * 1024):
    """x: (..., H); gamma, beta: (H,). Returns same shape/dtype as x."""
    orig_shape = x.shape
    H = orig_shape[-1]
    x2 = x.reshape(-1, H)
    R = x2.shape[0]
    dtype = x.dtype

    # Lane-dense hidden dim: pad H to a multiple of 128 so stores are unmasked.
    Hp = ((H + 127) // 128) * 128
    if Hp != H:
        x2 = jnp.pad(x2, ((0, 0), (0, Hp - H)))
        gamma_p = jnp.pad(gamma, (0, Hp - H))
        beta_p = jnp.pad(beta, (0, Hp - H))
    else:
        gamma_p, beta_p = gamma, beta
    gamma2 = gamma_p.reshape(1, Hp)
    beta2 = beta_p.reshape(1, Hp)

    tm = row_tile if row_tile is not None else _pick_row_tile(R, Hp, dtype)

    # Pad rows so the grid is exact; padded rows are zeros and are sliced off.
    Rp = pl.cdiv(R, tm) * tm
    if Rp != R:
        x2 = jnp.pad(x2, ((0, Rp - R), (0, 0)))

    kernel = functools.partial(_layernorm_kernel, eps=float(eps), true_h=H)
    out = pl.pallas_call(
        kernel,
        out_shape=jax.ShapeDtypeStruct((Rp, Hp), dtype),
        grid_spec=pltpu.PrefetchScalarGridSpec(
            num_scalar_prefetch=0,
            grid=(Rp // tm,),
            in_specs=[
                pl.BlockSpec((tm, Hp), lambda i: (i, 0)),
                pl.BlockSpec((1, Hp), lambda i: (0, 0)),   # constant -> fetched once
                pl.BlockSpec((1, Hp), lambda i: (0, 0)),
            ],
            out_specs=pl.BlockSpec((tm, Hp), lambda i: (i, 0)),
        ),
        compiler_params=pltpu.CompilerParams(
            dimension_semantics=("parallel",),
            vmem_limit_bytes=int(vmem_limit_bytes),
        ),
    )(x2, gamma2, beta2)

    out = out[:R, :H]
    return out.reshape(orig_shape)


def _reference(x, gamma, beta, eps):
    u = jnp.mean(x, axis=-1, keepdims=True)
    s = jnp.mean((x - u) ** 2, axis=-1, keepdims=True)
    return gamma * ((x - u) / jnp.sqrt(s + eps)) + beta


if __name__ == "__main__":
    key = jax.random.PRNGKey(0)

    # Case 1: shapes implied by the module's typical usage (narrow hidden -> padded lanes)
    batch, seq, hidden = 2, 8, 32
    k1, k2 = jax.random.split(key)
    x1 = jax.random.normal(k1, (batch, seq, hidden), dtype=jnp.float32)
    g1 = jnp.ones((hidden,), dtype=jnp.float32)   # nn.Parameter(torch.ones)
    b1 = jnp.zeros((hidden,), dtype=jnp.float32)  # nn.Parameter(torch.zeros)
    y1 = jax.block_until_ready(bert_layer_norm(x1, g1, b1, eps=1e-12))
    ref1 = _reference(x1, g1, b1, 1e-12)
    assert y1.shape == x1.shape
    assert jnp.allclose(y1, ref1, atol=1e-5, rtol=1e-5), "mismatch vs reference (case 1)"

    # Case 2: lane-dense hidden + ragged row count (exercises row padding path)
    batch2, seq2, hidden2 = 2, 13, 256
    x2 = jax.random.normal(k2, (batch2, seq2, hidden2), dtype=jnp.float32)
    g2 = jnp.ones((hidden2,), dtype=jnp.float32)
    b2 = jnp.zeros((hidden2,), dtype=jnp.float32)
    y2 = jax.block_until_ready(bert_layer_norm(x2, g2, b2, eps=1e-12))
    ref2 = _reference(x2, g2, b2, 1e-12)
    assert y2.shape == x2.shape
    assert jnp.allclose(y2, ref2, atol=1e-5, rtol=1e-5), "mismatch vs reference (case 2)"

    print("KERNEL_OK")
</pallas_src>

<mosaic_0001>
module attributes {stable_mosaic.version = 11 : i64} {
  func.func @_layernorm_kernel(%arg0: i32, %arg1: memref<16x128xf32, #tpu.memory_space<vmem>>, %arg2: memref<1x128xf32, #tpu.memory_space<vmem>>, %arg3: memref<1x128xf32, #tpu.memory_space<vmem>>, %arg4: memref<16x128xf32, #tpu.memory_space<vmem>>) attributes {dimension_semantics = [#tpu.dimension_semantics<parallel>], iteration_bounds = array<i64: 1>, scalar_prefetch = 0 : i64, scratch_operands = 0 : i64, tpu.core_type = #tpu.core_type<tc>, window_params = [{transform_indices = @transform_0, window_bounds = array<i64: 16, 128>}, {pipeline_mode = #tpu.pipeline_mode<synchronous>, transform_indices = @transform_1, window_bounds = array<i64: 1, 128>}, {pipeline_mode = #tpu.pipeline_mode<synchronous>, transform_indices = @transform_2, window_bounds = array<i64: 1, 128>}, {transform_indices = @transform_3, window_bounds = array<i64: 16, 128>}]} {
    %c0 = arith.constant 0 : index
    %c0_0 = arith.constant 0 : index
    %0 = vector.load %arg1[%c0, %c0_0] : memref<16x128xf32, #tpu.memory_space<vmem>>, vector<16x128xf32>
    %1 = tpu.iota {dimensions = array<i32: 1>} : vector<16x128xi32>
    %c32_i32 = arith.constant 32 : i32
    %2 = vector.broadcast %c32_i32 : i32 to vector<16x128xi32>
    %3 = arith.cmpi slt, %1, %2 : vector<16x128xi32>
    %cst = arith.constant 0.000000e+00 : f32
    %4 = vector.broadcast %cst : f32 to vector<16x128xf32>
    %5 = arith.select %3, %0, %4 : vector<16x128xi1>, vector<16x128xf32>
    %cst_1 = arith.constant dense<0.000000e+00> : vector<16xf32>
    %6 = vector.multi_reduction <add>, %5, %cst_1 [1] : vector<16x128xf32> to vector<16xf32>
    %7 = vector.shape_cast %6 : vector<16xf32> to vector<16x1xf32>
    %cst_2 = arith.constant 3.125000e-02 : f32
    %8 = vector.broadcast %cst_2 : f32 to vector<16x1xf32>
    %9 = arith.mulf %7, %8 : vector<16x1xf32>
    %10 = vector.broadcast %9 : vector<16x1xf32> to vector<16x128xf32>
    %11 = arith.subf %0, %10 : vector<16x128xf32>
    %cst_3 = arith.constant 0.000000e+00 : f32
    %12 = vector.broadcast %cst_3 : f32 to vector<16x128xf32>
    %13 = arith.select %3, %11, %12 : vector<16x128xi1>, vector<16x128xf32>
    %14 = arith.mulf %13, %13 : vector<16x128xf32>
    %cst_4 = arith.constant dense<0.000000e+00> : vector<16xf32>
    %15 = vector.multi_reduction <add>, %14, %cst_4 [1] : vector<16x128xf32> to vector<16xf32>
    %16 = vector.shape_cast %15 : vector<16xf32> to vector<16x1xf32>
    %cst_5 = arith.constant 3.125000e-02 : f32
    %17 = vector.broadcast %cst_5 : f32 to vector<16x1xf32>
    %18 = arith.mulf %16, %17 : vector<16x1xf32>
    %cst_6 = arith.constant 9.99999996E-13 : f32
    %19 = vector.broadcast %cst_6 : f32 to vector<16x1xf32>
    %20 = arith.addf %18, %19 : vector<16x1xf32>
    %21 = math.rsqrt %20 : vector<16x1xf32>
    %22 = vector.broadcast %21 : vector<16x1xf32> to vector<16x128xf32>
    %23 = arith.mulf %13, %22 : vector<16x128xf32>
    %c0_7 = arith.constant 0 : index
    %c0_8 = arith.constant 0 : index
    %24 = vector.load %arg2[%c0_7, %c0_8] : memref<1x128xf32, #tpu.memory_space<vmem>>, vector<1x128xf32>
    %c0_9 = arith.constant 0 : index
    %c0_10 = arith.constant 0 : index
    %25 = vector.load %arg3[%c0_9, %c0_10] : memref<1x128xf32, #tpu.memory_space<vmem>>, vector<1x128xf32>
    %26 = vector.broadcast %24 : vector<1x128xf32> to vector<16x128xf32>
    %27 = arith.mulf %26, %23 : vector<16x128xf32>
    %28 = vector.broadcast %25 : vector<1x128xf32> to vector<16x128xf32>
    %29 = arith.addf %27, %28 : vector<16x128xf32>
    %c0_11 = arith.constant 0 : index
    %c0_12 = arith.constant 0 : index
    %30 = vector.load %arg4[%c0_11, %c0_12] : memref<16x128xf32, #tpu.memory_space<vmem>>, vector<16x128xf32>
    tpu.vector_store %arg4[%c0_11, %c0_12], %29 {strides = array<i32>} : memref<16x128xf32, #tpu.memory_space<vmem>>, vector<16x128xf32>,
    return
  }
  func.func @transform_0(%arg0: i32) -> (i32, i32) {
    %c0_i32 = arith.constant 0 : i32
    %c0_i32_0 = arith.constant 0 : i32
    return %arg0, %c0_i32 : i32, i32
  }
  func.func @transform_1(%arg0: i32) -> (i32, i32) {
    %c0_i32 = arith.constant 0 : i32
    %c0_i32_0 = arith.constant 0 : i32
    %c0_i32_1 = arith.constant 0 : i32
    return %c0_i32, %c0_i32_0 : i32, i32
  }
  func.func @transform_2(%arg0: i32) -> (i32, i32) {
    %c0_i32 = arith.constant 0 : i32
    %c0_i32_0 = arith.constant 0 : i32
    %c0_i32_1 = arith.constant 0 : i32
    return %c0_i32, %c0_i32_0 : i32, i32
  }
  func.func @transform_3(%arg0: i32) -> (i32, i32) {
    %c0_i32 = arith.constant 0 : i32
    %c0_i32_0 = arith.constant 0 : i32
    return %arg0, %c0_i32 : i32, i32
  }
}

</mosaic_0001>

<llo_original>
// kernel: tpu_custom_call.1
$region0: #{tpu_custom_call.1}
  #allocation0 [shape = 'u32[]', space=smem, size = 0x4, offset = 0x4, fixed_abs, tag = 'smem constant byte address 0x4 - core index']
  #allocation1 [shape = 'u32[144,128]{1,0:T(1,128)}', space=vmem, size = 0x12000, scoped, tag = 'internal scratch']
  %s0 = inlined_call_operand.hbm [shape: f32[16,128], index: 0, kind: input, shape index: {}]
  %s1 = inlined_call_operand.vmem [shape: f32[1,128], index: 1, kind: input, shape index: {}]
  %s2 = inlined_call_operand.vmem [shape: f32[1,128], index: 2, kind: input, shape index: {}]
  %s3 = inlined_call_operand.hbm [shape: f32[16,128], index: 3, kind: output, shape index: {}]
  %s4 = sld [smem:[#allocation0]]
  $region26: #{tpu_custom_call.1} parent=0
    _
  %s6 = ssub.s32 1, %s4
  %s7 = scalar_select 0, %s6, %s4
  $region1: #{tpu_custom_call.1} parent=0
    #allocation2 [shape = 'u8[8192]{0}', space=vmem, size = 0x2000, scoped, tag = 'input window, operand 0, single buffered']
    #allocation3 [shape = 's32[1]{0}', space=sflag, size = 0x4, scoped, tag = 'scoped memory for tpu_custom_call.1']
    #allocation4 [shape = 's32[1]{0}', space=sflag, size = 0x4, scoped, tag = 'scoped memory for tpu_custom_call.1']
    #allocation5 [shape = 'u8[8192]{0}', space=vmem, size = 0x2000, scoped, tag = 'output window, operand 0, single buffered']
    %8 = vsyncpa [#allocation3], 0
    %9 = vsyncpa [#allocation4], 0
    // Predicated region
    $region2: #{tpu_custom_call.1} parent=1 // pred_check
      _
    $region3: #{tpu_custom_call.1} parent=1 // pred_check_branch
      %11 = sbr.rel (0) target = $region5
    $region4: #{tpu_custom_call.1} parent=1 // pred_region
      %s13 = ssub.s32 256, 256
      %14 = vsyncadd [#allocation3], %s13
      %s15 = sshll.u32 [#allocation2], 4
      %s16 = int_to_ptr.vmem [resolvable:$true] %s15
      %21 = dma.hbm_to_vmem [thread:$0]  %s0, 256, %s16, [#allocation3], 128, 128, 8
    $region5: #{tpu_custom_call.1} parent=1 // pred_fallthru
      _
    // Predicated region
    $region6: #{tpu_custom_call.1} parent=1 // pred_check
      _
    $region7: #{tpu_custom_call.1} parent=1 // pred_check_branch
      %23 = sbr.rel (0) target = $region9
    $region8: #{tpu_custom_call.1} parent=1 // pred_region
      _
    $region9: #{tpu_custom_call.1} parent=1 // pred_fallthru
      _
    // Predicated region
    $region10: #{tpu_custom_call.1} parent=1 // pred_check
      _
    $region11: #{tpu_custom_call.1} parent=1 // pred_check_branch
      %25 = sbr.rel (0) target = $region13
    $region12: #{tpu_custom_call.1} parent=1 // pred_region
      _
    $region13: #{tpu_custom_call.1} parent=1 // pred_fallthru
      _
    // Predicated region
    $region14: #{tpu_custom_call.1} parent=1 // pred_check
      _
    $region15: #{tpu_custom_call.1} parent=1 // pred_check_branch
      %27 = sbr.rel (0) target = $region17
    $region16: #{tpu_custom_call.1} parent=1 // pred_region
      %28 = dma.done [#allocation3], 256
    $region17: #{tpu_custom_call.1} parent=1 // pred_fallthru
      _
    %v29 = vld [vmem:[#allocation2] sm:$0xff]
    %v30 = vld [vmem:[#allocation2 + $0x8] sm:$0xff]
    %v31 = vlaneseq
    %v32 = vand.u32 %v31, 127
    %vm33 = vcmp.lt.s32.totalorder %v32, 32
    %v34 = vsel %vm33, %v29, 0.0
    %v35 = vsel %vm33, %v30, 0.0
    %36 = vadd.xlane.f32.xlu0 %v34
    %v37 = vpop.xlane.xlu0 %36
    %38 = vadd.xlane.f32.xlu0 %v35
    %v39 = vpop.xlane.xlu0 %38
    %v40 = vmul.f32 %v37, 0.03125
    %v41 = vmul.f32 %v39, 0.03125
    %v42 = vsub.f32 %v29, %v40
    %v43 = vsub.f32 %v30, %v41
    %v44 = vsel %vm33, %v42, 0.0
    %v45 = vsel %vm33, %v43, 0.0
    %v46 = vmul.f32 %v44, %v44
    %v47 = vmul.f32 %v45, %v45
    %48 = vadd.xlane.f32.xlu0 %v46
    %v49 = vpop.xlane.xlu0 %48
    %50 = vadd.xlane.f32.xlu0 %v47
    %v51 = vpop.xlane.xlu0 %50
    %v52 = vmul.f32 %v49, 0.03125
    %v53 = vmul.f32 %v51, 0.03125
    %v54 = vadd.f32 %v52, 1e-12
    %v55 = vadd.f32 %v53, 1e-12
    %v56 = vrsqrt.pop %v54
    %v57 = vrsqrt.pop %v55
    %v58 = vmul.f32 %v44, %v56
    %v59 = vmul.f32 %v45, %v57
    %v60 = vld [vmem:[%s1] sm:$0x1]
    %v61 = vld [vmem:[%s2] sm:$0x1]
    %v63 = vlaneseq
    %v64 = vshrl.u32 %v63, 7
    %v65 = vsub.s32 0, %v64
    %v66 = vrot.slane %v60, %v65
    %v68 = vmul.f32 %v66, %v58
    %v69 = vmul.f32 %v66, %v59
    %v71 = vlaneseq
    %v72 = vshrl.u32 %v71, 7
    %v73 = vsub.s32 0, %v72
    %v74 = vrot.slane %v61, %v73
    %v76 = vadd.f32 %v68, %v74
    %v77 = vadd.f32 %v69, %v74
    %78 = vst [vmem:[#allocation5] sm:$0xff] %v76
    %79 = vst [vmem:[#allocation5 + $0x8] sm:$0xff] %v77
    // Predicated region
    $region18: #{tpu_custom_call.1} parent=1 // pred_check
      _
    $region19: #{tpu_custom_call.1} parent=1 // pred_check_branch
      %81 = sbr.rel (0) target = $region21
    $region20: #{tpu_custom_call.1} parent=1 // pred_region
      %s83 = ssub.s32 256, 256
      %84 = vsyncadd [#allocation4], %s83
      %s85 = sshll.u32 [#allocation5], 4
      %s86 = int_to_ptr.vmem [resolvable:$true] %s85
      %91 = dma.vmem_to_hbm [thread:$0]  %s86, 256, %s3, [#allocation4], 128, 128, 8
    $region21: #{tpu_custom_call.1} parent=1 // pred_fallthru
      _
    // Predicated region
    $region22: #{tpu_custom_call.1} parent=1 // pred_check
      _
    $region23: #{tpu_custom_call.1} parent=1 // pred_check_branch
      %93 = sbr.rel (0) target = $region25
    $region24: #{tpu_custom_call.1} parent=1 // pred_region
      %94 = dma.done [#allocation4], 256
    $region25: #{tpu_custom_call.1} parent=1 // pred_fallthru
      _
    %95 = vsyncpa [#allocation3], 1
    %96 = vsyncpa [#allocation4], 1

</llo_original>
